<compile_context>
chip_gen: v5e
topology: v5e:2x2
jax: 0.10.0
libtpu: 0.0.40
codegen_flags: <defaults>
</compile_context>

<pallas_src>
import math
import functools

import jax
import jax.numpy as jnp
from jax import lax
from jax.experimental import pallas as pl
from jax.experimental.pallas import tpu as pltpu


_LANE = 128
_SUBLANE = 8
_MXU_ALIGN = 256                       # v6e / v7x MXU tile (also a 128-multiple for v5e)
_VMEM_BUDGET = 36 * 1024 * 1024        # working-set target, safely under v7x's 64 MiB
_VMEM_LIMIT = 48 * 1024 * 1024         # scoped VMEM limit requested from Mosaic


def _round_up(n, m):
    return ((n + m - 1) // m) * m


def _select_tiles(B, C, D, in_bytes, out_bytes, block_b, block_c):
    """Pick lane/MXU-aligned (bt, ct) tiles that fit the VMEM budget."""
    # Class tile: lane aligned, target block_c (a 256-multiple by default).
    ct = min(_round_up(block_c, _LANE), _round_up(C, _LANE))
    # Shrink ct if the untiled D makes the weight tile alone dominate the budget.
    # TODO(synk): D (in_features) is untiled; extremely large embedding dims would
    # need a K-tiled accumulator variant of this kernel.
    while ct > _LANE and ct * D * (3 * in_bytes + 4) > _VMEM_BUDGET // 2:
        ct -= _LANE

    # Bytes independent of bt: double-buffered weight tile + its f32/normalized copies.
    fixed = ct * D * (3 * in_bytes + 4)
    # Bytes per batch row: x tile (x2 buffers) + out tile (x2) + ~2 f32 epilogue temps.
    per_row = 2 * D * in_bytes + ct * (2 * out_bytes + 2 * 4)
    cap = max(_SUBLANE, (_VMEM_BUDGET - fixed) // per_row)
    if block_b is not None:
        cap = min(cap, block_b)

    b_full = _round_up(B, _SUBLANE)
    if b_full <= cap:
        bt = b_full                           # whole batch resident -> weight read once
    elif cap >= _MXU_ALIGN:
        bt = (cap // _MXU_ALIGN) * _MXU_ALIGN
    else:
        bt = (cap // _SUBLANE) * _SUBLANE
    return max(_SUBLANE, bt), ct


def _arcface_kernel(x_ref, w_ref, label_ref, out_ref, *,
                    s, cos_m, sin_m, threshold, mm, ls_eps, easy_margin,
                    out_features, c_tile):
    """One (bt, ct) output tile of the ArcFace head.

    x_ref:     (bt, D)  compute_dtype  pre-normalized batch tile (resident)
    w_ref:     (ct, D)  compute_dtype  raw weight tile (normalized here, read once)
    label_ref: (bt, 1)  i32            global target class id per batch row
    out_ref:   (bt, ct) out_dtype
    """
    j = pl.program_id(0)                       # class-tile index (outer grid axis)

    # Normalize the weight tile in f32 and feed the MXU the compute dtype.
    # (ct,1)->(ct,D) is a native lane broadcast -- no relayout -- and each weight
    # tile is visited exactly once, so this replaces a wrapper-side HBM pass.
    wf = w_ref[...].astype(jnp.float32)
    w_inv = lax.rsqrt(jnp.maximum(jnp.sum(wf * wf, axis=1, keepdims=True), 1e-24))
    wn = (wf * w_inv).astype(w_ref.dtype)

    # cosine = x_hat @ w_hat^T : contract last dims of both operands directly on
    # the MXU (native transposed-RHS matmul; no in-kernel transpose), f32 accumulate.
    cosine = lax.dot_general(
        x_ref[...], wn,
        dimension_numbers=(((1,), (1,)), ((), ())),
        preferred_element_type=jnp.float32)

    # Target mask: fold the class-tile offset into the (bt,1) label instead of
    # adding it to the full-tile iota.
    local_label = label_ref[...] - j * c_tile                       # (bt, 1)
    is_target = lax.broadcasted_iota(jnp.int32, cosine.shape, 1) == local_label

    if ls_eps > 0.0:
        # Label smoothing mixes phi into every column -> full-tile phi needed.
        sine = jnp.sqrt(jnp.clip(1.0 - cosine * cosine, 0.0, 1.0))
        phi = cosine * cos_m - sine * sin_m
        if easy_margin:
            phi = jnp.where(cosine > 0.0, phi, cosine)
        else:
            phi = jnp.where(cosine > threshold, phi, cosine - mm)
        one_hot = ((1.0 - ls_eps) * is_target.astype(jnp.float32)
                   + ls_eps / out_features)
        out = (one_hot * phi + (1.0 - one_hot) * cosine) * s
    else:
        # Only the target column of each row uses phi: pull cos(theta_y) out with a
        # masked lane-reduce, evaluate the margin on the (bt,1) vector, then apply a
        # sparse fixup.  Removes the full-tile sqrt / selects from the epilogue.
        cos_t = jnp.sum(jnp.where(is_target, cosine, 0.0), axis=1, keepdims=True)
        sin_t = jnp.sqrt(jnp.clip(1.0 - cos_t * cos_t, 0.0, 1.0))
        phi_t = cos_t * cos_m - sin_t * sin_m
        if easy_margin:
            phi_t = jnp.where(cos_t > 0.0, phi_t, cos_t)
        else:
            phi_t = jnp.where(cos_t > threshold, phi_t, cos_t - mm)
        out = (cosine + is_target.astype(jnp.float32) * (phi_t - cos_t)) * s

    out_ref[...] = out.astype(out_ref.dtype)


def arc_margin_product(x, weight, label, *, s=30.0, m=0.5,
                       easy_margin=False, ls_eps=0.0,
                       compute_dtype=jnp.bfloat16, out_dtype=jnp.float32,
                       block_b=None, block_c=512):
    """ArcMarginProduct forward. x: (B, D), weight: (C, D), label: (B,) int.

    compute_dtype: MXU operand dtype (bf16 default; pass jnp.float32 for exact f32).
    out_dtype:     logits dtype (f32 default to preserve module semantics).
    block_b:       optional cap on the batch tile; default grows it to all of B
                   (so the weight matrix is streamed from HBM exactly once).
    """
    B, D = x.shape
    C, D2 = weight.shape
    assert D == D2

    in_bytes = jnp.dtype(compute_dtype).itemsize
    out_bytes = jnp.dtype(out_dtype).itemsize
    bt, ct = _select_tiles(B, C, D, in_bytes, out_bytes, block_b, block_c)
    Bp, Cp = _round_up(B, bt), _round_up(C, ct)

    # Normalize x once in the wrapper (x is tiny next to weight/output traffic),
    # then cast to the MXU compute dtype.  F.normalize eps = 1e-12.
    xf = x.astype(jnp.float32)
    x_inv = lax.rsqrt(jnp.maximum(jnp.sum(xf * xf, axis=1, keepdims=True), 1e-24))
    xn = (xf * x_inv).astype(compute_dtype)

    # Weight is only dtype-cast here; its row normalization happens in-kernel so
    # the matrix is streamed from HBM exactly once by the kernel.
    w = weight.astype(compute_dtype)
    label2d = label.astype(jnp.int32).reshape(B, 1)

    # Pad to tile multiples (padded weight/x rows are zero -> cosine 0; padded
    # labels are -1 -> never match).  Output is sliced back below.
    if Bp != B:
        xn = jnp.pad(xn, ((0, Bp - B), (0, 0)))
        label2d = jnp.pad(label2d, ((0, Bp - B), (0, 0)), constant_values=-1)
    if Cp != C:
        w = jnp.pad(w, ((0, Cp - C), (0, 0)))

    grid = (Cp // ct, Bp // bt)    # class tiles outer (megacore-split axis), batch inner

    kernel = functools.partial(
        _arcface_kernel,
        s=float(s),
        cos_m=math.cos(m),
        sin_m=math.sin(m),
        threshold=math.cos(math.pi - m),
        mm=math.sin(math.pi - m) * m,
        ls_eps=float(ls_eps),
        easy_margin=bool(easy_margin),
        out_features=C,
        c_tile=ct,
    )

    out = pl.pallas_call(
        kernel,
        out_shape=jax.ShapeDtypeStruct((Bp, Cp), out_dtype),
        grid=grid,
        in_specs=[
            pl.BlockSpec((bt, D), lambda j, i: (i, 0)),   # normalized x (resident)
            pl.BlockSpec((ct, D), lambda j, i: (j, 0)),   # weight tile (streamed once)
            pl.BlockSpec((bt, 1), lambda j, i: (i, 0)),   # labels
        ],
        out_specs=pl.BlockSpec((bt, ct), lambda j, i: (i, j)),
        compiler_params=pltpu.CompilerParams(
            dimension_semantics=("parallel", "parallel"),
            vmem_limit_bytes=_VMEM_LIMIT),
    )(xn, w, label2d)

    if Bp != B or Cp != C:
        out = out[:B, :C]
    return out


def _reference(x, weight, label, *, s=30.0, m=0.5, easy_margin=False, ls_eps=0.0):
    xn = x / jnp.maximum(jnp.linalg.norm(x, axis=1, keepdims=True), 1e-12)
    wn = weight / jnp.maximum(jnp.linalg.norm(weight, axis=1, keepdims=True), 1e-12)
    cosine = xn @ wn.T
    sine = jnp.sqrt(jnp.clip(1.0 - cosine ** 2, 0.0, 1.0))
    phi = cosine * math.cos(m) - sine * math.sin(m)
    if easy_margin:
        phi = jnp.where(cosine > 0, phi, cosine)
    else:
        phi = jnp.where(cosine > math.cos(math.pi - m),
                        phi, cosine - math.sin(math.pi - m) * m)
    one_hot = jax.nn.one_hot(label, weight.shape[0], dtype=jnp.float32)
    if ls_eps > 0:
        one_hot = (1 - ls_eps) * one_hot + ls_eps / weight.shape[0]
    return (one_hot * phi + (1.0 - one_hot) * cosine) * s


if __name__ == "__main__":
    key = jax.random.PRNGKey(0)

    # --- Test 1: module-sized small shapes, exact f32 path (tight tolerance) ---
    k_x, k_w, k_l = jax.random.split(key, 3)
    B, in_features, out_features = 8, 32, 16
    x = jax.random.normal(k_x, (B, in_features), dtype=jnp.float32)
    bound = math.sqrt(6.0 / (in_features + out_features))   # xavier_uniform_
    weight = jax.random.uniform(k_w, (out_features, in_features),
                                dtype=jnp.float32, minval=-bound, maxval=bound)
    label = jax.random.randint(k_l, (B,), 0, out_features, dtype=jnp.int32)

    out = jax.block_until_ready(
        arc_margin_product(x, weight, label, s=30.0, m=0.5, easy_margin=False,
                           ls_eps=0.0, compute_dtype=jnp.float32))
    ref = _reference(x, weight, label, s=30.0, m=0.5, easy_margin=False, ls_eps=0.0)
    assert out.shape == (B, out_features)
    assert jnp.allclose(out, ref, atol=1e-4, rtol=1e-4), "mismatch (test 1)"

    out1b = jax.block_until_ready(
        arc_margin_product(x, weight, label, s=30.0, m=0.5, easy_margin=True,
                           ls_eps=0.1, compute_dtype=jnp.float32))
    ref1b = _reference(x, weight, label, s=30.0, m=0.5, easy_margin=True, ls_eps=0.1)
    assert jnp.allclose(out1b, ref1b, atol=1e-4, rtol=1e-4), "mismatch (test 1b)"

    # --- Test 2: aligned shapes forcing a 2x2 tiled grid (class-offset path), f32 ---
    k_x2, k_w2, k_l2 = jax.random.split(jax.random.PRNGKey(1), 3)
    B2, D2, C2 = 16, 128, 256
    x2 = jax.random.normal(k_x2, (B2, D2), dtype=jnp.float32)
    bound2 = math.sqrt(6.0 / (D2 + C2))
    w2 = jax.random.uniform(k_w2, (C2, D2), dtype=jnp.float32,
                            minval=-bound2, maxval=bound2)
    l2 = jax.random.randint(k_l2, (B2,), 0, C2, dtype=jnp.int32)

    out2 = jax.block_until_ready(
        arc_margin_product(x2, w2, l2, s=30.0, m=0.5, easy_margin=False, ls_eps=0.0,
                           compute_dtype=jnp.float32, block_b=8, block_c=128))
    ref2 = _reference(x2, w2, l2, s=30.0, m=0.5, easy_margin=False, ls_eps=0.0)
    assert jnp.allclose(out2, ref2, atol=1e-4, rtol=1e-4), "mismatch (test 2, tiled)"

    # --- Test 3: non-divisible B/C (padding path) + default bf16 MXU operands ---
    k_x3, k_w3, k_l3 = jax.random.split(jax.random.PRNGKey(2), 3)
    B3, D3, C3 = 50, 96, 300            # B pads 50->56, C pads 300->384, grid (3, 1)
    x3 = jax.random.normal(k_x3, (B3, D3), dtype=jnp.float32)
    bound3 = math.sqrt(6.0 / (D3 + C3))
    w3 = jax.random.uniform(k_w3, (C3, D3), dtype=jnp.float32,
                            minval=-bound3, maxval=bound3)
    l3 = jax.random.randint(k_l3, (B3,), 0, C3, dtype=jnp.int32)

    out3 = jax.block_until_ready(
        arc_margin_product(x3, w3, l3, s=30.0, m=0.5, easy_margin=False,
                           ls_eps=0.0, block_c=128))
    ref3 = _reference(x3, w3, l3, s=30.0, m=0.5, easy_margin=False, ls_eps=0.0)
    assert out3.shape == (B3, C3)
    assert jnp.allclose(out3, ref3, atol=0.5, rtol=0.05), "mismatch (test 3, bf16/pad)"

    # --- Test 4: bf16 path with label smoothing + easy margin ---
    out4 = jax.block_until_ready(
        arc_margin_product(x3, w3, l3, s=30.0, m=0.5, easy_margin=True,
                           ls_eps=0.1, block_c=128))
    ref4 = _reference(x3, w3, l3, s=30.0, m=0.5, easy_margin=True, ls_eps=0.1)
    assert jnp.allclose(out4, ref4, atol=0.5, rtol=0.05), "mismatch (test 4, bf16/ls)"

    print("KERNEL_OK")
</pallas_src>

<mosaic_0001>
module attributes {stable_mosaic.version = 11 : i64} {
  func.func @_arcface_kernel(%arg0: i32, %arg1: i32, %arg2: memref<8x32xf32, #tpu.memory_space<vmem>>, %arg3: memref<128x32xf32, #tpu.memory_space<vmem>>, %arg4: memref<8x1xi32, #tpu.memory_space<vmem>>, %arg5: memref<8x128xf32, #tpu.memory_space<vmem>>) attributes {dimension_semantics = [#tpu.dimension_semantics<parallel>, #tpu.dimension_semantics<parallel>], iteration_bounds = array<i64: 1, 1>, scalar_prefetch = 0 : i64, scratch_operands = 0 : i64, tpu.core_type = #tpu.core_type<tc>, window_params = [{transform_indices = @transform_0, window_bounds = array<i64: 8, 32>}, {transform_indices = @transform_1, window_bounds = array<i64: 128, 32>}, {transform_indices = @transform_2, window_bounds = array<i64: 8, 1>}, {transform_indices = @transform_3, window_bounds = array<i64: 8, 128>}]} {
    %c0 = arith.constant 0 : index
    %c0_0 = arith.constant 0 : index
    %0 = vector.load %arg3[%c0, %c0_0] : memref<128x32xf32, #tpu.memory_space<vmem>>, vector<128x32xf32>
    %1 = arith.mulf %0, %0 : vector<128x32xf32>
    %cst = arith.constant dense<0.000000e+00> : vector<128xf32>
    %2 = vector.multi_reduction <add>, %1, %cst [1] : vector<128x32xf32> to vector<128xf32>
    %3 = vector.shape_cast %2 : vector<128xf32> to vector<128x1xf32>
    %cst_1 = arith.constant 1.000000e-24 : f32
    %4 = vector.broadcast %cst_1 : f32 to vector<128x1xf32>
    %5 = arith.maximumf %3, %4 : vector<128x1xf32>
    %6 = math.rsqrt %5 : vector<128x1xf32>
    %7 = vector.broadcast %6 : vector<128x1xf32> to vector<128x32xf32>
    %8 = arith.mulf %0, %7 : vector<128x32xf32>
    %c0_2 = arith.constant 0 : index
    %c0_3 = arith.constant 0 : index
    %9 = vector.load %arg2[%c0_2, %c0_3] : memref<8x32xf32, #tpu.memory_space<vmem>>, vector<8x32xf32>
    %cst_4 = arith.constant dense<0.000000e+00> : vector<8x128xf32>
    %10 = tpu.matmul %9, %8, %cst_4 {dimension_numbers = #tpu.dot_dimension_numbers<[1], [1], [0], [0], [0, 0, 1, 0], [], []>} : vector<8x32xf32>, vector<128x32xf32>, vector<8x128xf32> -> vector<8x128xf32>
    %c0_5 = arith.constant 0 : index
    %c0_6 = arith.constant 0 : index
    %11 = vector.load %arg4[%c0_5, %c0_6] : memref<8x1xi32, #tpu.memory_space<vmem>>, vector<8x1xi32>
    %c128_i32 = arith.constant 128 : i32
    %12 = arith.muli %arg0, %c128_i32 : i32
    %13 = vector.broadcast %12 : i32 to vector<8x1xi32>
    %14 = arith.subi %11, %13 : vector<8x1xi32>
    %15 = tpu.iota {dimensions = array<i32: 1>} : vector<8x128xi32>
    %16 = vector.broadcast %14 : vector<8x1xi32> to vector<8x128xi32>
    %17 = arith.cmpi eq, %15, %16 : vector<8x128xi32>
    %cst_7 = arith.constant 0.000000e+00 : f32
    %18 = vector.broadcast %cst_7 : f32 to vector<8x128xf32>
    %19 = arith.select %17, %10, %18 : vector<8x128xi1>, vector<8x128xf32>
    %cst_8 = arith.constant dense<0.000000e+00> : vector<8xf32>
    %20 = vector.multi_reduction <add>, %19, %cst_8 [1] : vector<8x128xf32> to vector<8xf32>
    %21 = vector.shape_cast %20 : vector<8xf32> to vector<8x1xf32>
    %22 = arith.mulf %21, %21 : vector<8x1xf32>
    %cst_9 = arith.constant 1.000000e+00 : f32
    %23 = vector.broadcast %cst_9 : f32 to vector<8x1xf32>
    %24 = arith.subf %23, %22 : vector<8x1xf32>
    %cst_10 = arith.constant 0.000000e+00 : f32
    %cst_11 = arith.constant 1.000000e+00 : f32
    %25 = vector.broadcast %cst_10 : f32 to vector<8x1xf32>
    %26 = arith.maximumf %25, %24 : vector<8x1xf32>
    %27 = vector.broadcast %cst_11 : f32 to vector<8x1xf32>
    %28 = arith.minimumf %27, %26 : vector<8x1xf32>
    %29 = math.sqrt %28 : vector<8x1xf32>
    %cst_12 = arith.constant 0.87758255 : f32
    %30 = vector.broadcast %cst_12 : f32 to vector<8x1xf32>
    %31 = arith.mulf %21, %30 : vector<8x1xf32>
    %cst_13 = arith.constant 0.47942555 : f32
    %32 = vector.broadcast %cst_13 : f32 to vector<8x1xf32>
    %33 = arith.mulf %29, %32 : vector<8x1xf32>
    %34 = arith.subf %31, %33 : vector<8x1xf32>
    %cst_14 = arith.constant -0.87758255 : f32
    %35 = vector.broadcast %cst_14 : f32 to vector<8x1xf32>
    %36 = arith.cmpf ogt, %21, %35 : vector<8x1xf32>
    %cst_15 = arith.constant 0.239712775 : f32
    %37 = vector.broadcast %cst_15 : f32 to vector<8x1xf32>
    %38 = arith.subf %21, %37 : vector<8x1xf32>
    %39 = arith.select %36, %34, %38 : vector<8x1xi1>, vector<8x1xf32>
    %40 = arith.extui %17 : vector<8x128xi1> to vector<8x128xi32>
    %41 = arith.sitofp %40 : vector<8x128xi32> to vector<8x128xf32>
    %42 = arith.subf %39, %21 : vector<8x1xf32>
    %43 = vector.broadcast %42 : vector<8x1xf32> to vector<8x128xf32>
    %44 = arith.mulf %41, %43 : vector<8x128xf32>
    %45 = arith.addf %10, %44 : vector<8x128xf32>
    %cst_16 = arith.constant 3.000000e+01 : f32
    %46 = vector.broadcast %cst_16 : f32 to vector<8x128xf32>
    %47 = arith.mulf %45, %46 : vector<8x128xf32>
    %c0_17 = arith.constant 0 : index
    %c0_18 = arith.constant 0 : index
    %48 = vector.load %arg5[%c0_17, %c0_18] : memref<8x128xf32, #tpu.memory_space<vmem>>, vector<8x128xf32>
    tpu.vector_store %arg5[%c0_17, %c0_18], %47 {strides = array<i32>} : memref<8x128xf32, #tpu.memory_space<vmem>>, vector<8x128xf32>,
    return
  }
  func.func @transform_0(%arg0: i32, %arg1: i32) -> (i32, i32) {
    %c0_i32 = arith.constant 0 : i32
    %c0_i32_0 = arith.constant 0 : i32
    return %arg1, %c0_i32 : i32, i32
  }
  func.func @transform_1(%arg0: i32, %arg1: i32) -> (i32, i32) {
    %c0_i32 = arith.constant 0 : i32
    %c0_i32_0 = arith.constant 0 : i32
    return %arg0, %c0_i32 : i32, i32
  }
  func.func @transform_2(%arg0: i32, %arg1: i32) -> (i32, i32) {
    %c0_i32 = arith.constant 0 : i32
    %c0_i32_0 = arith.constant 0 : i32
    return %arg1, %c0_i32 : i32, i32
  }
  func.func @transform_3(%arg0: i32, %arg1: i32) -> (i32, i32) {
    %c0_i32 = arith.constant 0 : i32
    return %arg1, %arg0 : i32, i32
  }
}

</mosaic_0001>

<llo_original>
// kernel: tpu_custom_call.1
$region0: #{tpu_custom_call.1}
  #allocation0 [shape = 'u32[]', space=smem, size = 0x4, offset = 0x4, fixed_abs, tag = 'smem constant byte address 0x4 - core index']
  #allocation1 [shape = 'u32[72,128]{1,0:T(1,128)}', space=vmem, size = 0x9000, scoped, tag = 'internal scratch']
  %s0 = inlined_call_operand.vmem [shape: f32[8,32], index: 0, kind: input, shape index: {}]
  %s1 = inlined_call_operand.vmem [shape: f32[128,32], index: 1, kind: input, shape index: {}]
  %s2 = inlined_call_operand.vmem [shape: s32[8,1], index: 2, kind: input, shape index: {}]
  %s3 = inlined_call_operand.hbm [shape: f32[8,128], index: 3, kind: output, shape index: {}]
  %s4 = sld [smem:[#allocation0]]
  $region22: #{tpu_custom_call.1} parent=0
    _
  %s6 = ssub.s32 1, %s4
  %s7 = scalar_select 0, %s6, %s4
  $region1: #{tpu_custom_call.1} parent=0
    #allocation2 [shape = 'u8[4096]{0}', space=vmem, size = 0x1000, scoped, tag = 'output window, operand 0, single buffered']
    #allocation3 [shape = 's32[1]{0}', space=sflag, size = 0x4, scoped, tag = 'scoped memory for tpu_custom_call.1']
    %8 = vsyncpa [#allocation3], 0
    // Predicated region
    $region2: #{tpu_custom_call.1} parent=1 // pred_check
      _
    $region3: #{tpu_custom_call.1} parent=1 // pred_check_branch
      %10 = sbr.rel (0) target = $region5
    $region4: #{tpu_custom_call.1} parent=1 // pred_region
      _
    $region5: #{tpu_custom_call.1} parent=1 // pred_fallthru
      _
    // Predicated region
    $region6: #{tpu_custom_call.1} parent=1 // pred_check
      _
    $region7: #{tpu_custom_call.1} parent=1 // pred_check_branch
      %12 = sbr.rel (0) target = $region9
    $region8: #{tpu_custom_call.1} parent=1 // pred_region
      _
    $region9: #{tpu_custom_call.1} parent=1 // pred_fallthru
      _
    // Predicated region
    $region10: #{tpu_custom_call.1} parent=1 // pred_check
      _
    $region11: #{tpu_custom_call.1} parent=1 // pred_check_branch
      %14 = sbr.rel (0) target = $region13
    $region12: #{tpu_custom_call.1} parent=1 // pred_region
      _
    $region13: #{tpu_custom_call.1} parent=1 // pred_fallthru
      _
    %v15 = vld [vmem:[%s1] sm:$0xff]
    %v16 = vld [vmem:[%s1 + $0x8] sm:$0xff]
    %v17 = vld [vmem:[%s1 + $0x10] sm:$0xff]
    %v18 = vld [vmem:[%s1 + $0x18] sm:$0xff]
    %v19 = vld [vmem:[%s1 + $0x20] sm:$0xff]
    %v20 = vld [vmem:[%s1 + $0x28] sm:$0xff]
    %v21 = vld [vmem:[%s1 + $0x30] sm:$0xff]
    %v22 = vld [vmem:[%s1 + $0x38] sm:$0xff]
    %v23 = vld [vmem:[%s1 + $0x40] sm:$0xff]
    %v24 = vld [vmem:[%s1 + $0x48] sm:$0xff]
    %v25 = vld [vmem:[%s1 + $0x50] sm:$0xff]
    %v26 = vld [vmem:[%s1 + $0x58] sm:$0xff]
    %v27 = vld [vmem:[%s1 + $0x60] sm:$0xff]
    %v28 = vld [vmem:[%s1 + $0x68] sm:$0xff]
    %v29 = vld [vmem:[%s1 + $0x70] sm:$0xff]
    %v30 = vld [vmem:[%s1 + $0x78] sm:$0xff]
    %v31 = vmul.f32 %v15, %v15
    %v32 = vmul.f32 %v16, %v16
    %v33 = vmul.f32 %v17, %v17
    %v34 = vmul.f32 %v18, %v18
    %v35 = vmul.f32 %v19, %v19
    %v36 = vmul.f32 %v20, %v20
    %v37 = vmul.f32 %v21, %v21
    %v38 = vmul.f32 %v22, %v22
    %v39 = vmul.f32 %v23, %v23
    %v40 = vmul.f32 %v24, %v24
    %v41 = vmul.f32 %v25, %v25
    %v42 = vmul.f32 %v26, %v26
    %v43 = vmul.f32 %v27, %v27
    %v44 = vmul.f32 %v28, %v28
    %v45 = vmul.f32 %v29, %v29
    %v46 = vmul.f32 %v30, %v30
    %vm47 = vcmask 261120
    %v48 = vsel %vm47, %v31, 0.0
    %49 = vadd.xlane.f32.xlu0 %v48
    %v50 = vpop.xlane.xlu0 %49
    %v51 = vsel %vm47, %v32, 0.0
    %52 = vadd.xlane.f32.xlu0 %v51
    %v53 = vpop.xlane.xlu0 %52
    %v54 = vsel %vm47, %v33, 0.0
    %55 = vadd.xlane.f32.xlu0 %v54
    %v56 = vpop.xlane.xlu0 %55
    %v57 = vsel %vm47, %v34, 0.0
    %58 = vadd.xlane.f32.xlu0 %v57
    %v59 = vpop.xlane.xlu0 %58
    %v60 = vsel %vm47, %v35, 0.0
    %61 = vadd.xlane.f32.xlu0 %v60
    %v62 = vpop.xlane.xlu0 %61
    %v63 = vsel %vm47, %v36, 0.0
    %64 = vadd.xlane.f32.xlu0 %v63
    %v65 = vpop.xlane.xlu0 %64
    %v66 = vsel %vm47, %v37, 0.0
    %67 = vadd.xlane.f32.xlu0 %v66
    %v68 = vpop.xlane.xlu0 %67
    %v69 = vsel %vm47, %v38, 0.0
    %70 = vadd.xlane.f32.xlu0 %v69
    %v71 = vpop.xlane.xlu0 %70
    %v72 = vsel %vm47, %v39, 0.0
    %73 = vadd.xlane.f32.xlu0 %v72
    %v74 = vpop.xlane.xlu0 %73
    %v75 = vsel %vm47, %v40, 0.0
    %76 = vadd.xlane.f32.xlu0 %v75
    %v77 = vpop.xlane.xlu0 %76
    %v78 = vsel %vm47, %v41, 0.0
    %79 = vadd.xlane.f32.xlu0 %v78
    %v80 = vpop.xlane.xlu0 %79
    %v81 = vsel %vm47, %v42, 0.0
    %82 = vadd.xlane.f32.xlu0 %v81
    %v83 = vpop.xlane.xlu0 %82
    %v84 = vsel %vm47, %v43, 0.0
    %85 = vadd.xlane.f32.xlu0 %v84
    %v86 = vpop.xlane.xlu0 %85
    %v87 = vsel %vm47, %v44, 0.0
    %88 = vadd.xlane.f32.xlu0 %v87
    %v89 = vpop.xlane.xlu0 %88
    %v90 = vsel %vm47, %v45, 0.0
    %91 = vadd.xlane.f32.xlu0 %v90
    %v92 = vpop.xlane.xlu0 %91
    %v93 = vsel %vm47, %v46, 0.0
    %94 = vadd.xlane.f32.xlu0 %v93
    %v95 = vpop.xlane.xlu0 %94
    %v96 = vmax.f32 %v50, 1e-24
    %v97 = vmax.f32 %v53, 1e-24
    %v98 = vmax.f32 %v56, 1e-24
    %v99 = vmax.f32 %v59, 1e-24
    %v100 = vmax.f32 %v62, 1e-24
    %v101 = vmax.f32 %v65, 1e-24
    %v102 = vmax.f32 %v68, 1e-24
    %v103 = vmax.f32 %v71, 1e-24
    %v104 = vmax.f32 %v74, 1e-24
    %v105 = vmax.f32 %v77, 1e-24
    %v106 = vmax.f32 %v80, 1e-24
    %v107 = vmax.f32 %v83, 1e-24
    %v108 = vmax.f32 %v86, 1e-24
    %v109 = vmax.f32 %v89, 1e-24
    %v110 = vmax.f32 %v92, 1e-24
    %v111 = vmax.f32 %v95, 1e-24
    %v112 = vrsqrt.pop %v96
    %v113 = vmul.f32 %v112, %v96
    %v114 = vmul.f32 %v113, %v112
    %v115 = vmul.f32 0.5, %v114
    %v116 = vsub.f32 1.5, %v115
    %v117 = vmul.f32 %v112, %v116
    %vm118 = vweird.f32 %v96
    %vm119 = vweird.f32 %v112
    %vm120 = vmor %vm118, %vm119
    %v121 = vsel %vm120, %v112, %v117
    %v122 = vrsqrt.pop %v97
    %v123 = vmul.f32 %v122, %v97
    %v124 = vmul.f32 %v123, %v122
    %v125 = vmul.f32 0.5, %v124
    %v126 = vsub.f32 1.5, %v125
    %v127 = vmul.f32 %v122, %v126
    %vm128 = vweird.f32 %v97
    %vm129 = vweird.f32 %v122
    %vm130 = vmor %vm128, %vm129
    %v131 = vsel %vm130, %v122, %v127
    %v132 = vrsqrt.pop %v98
    %v133 = vmul.f32 %v132, %v98
    %v134 = vmul.f32 %v133, %v132
    %v135 = vmul.f32 0.5, %v134
    %v136 = vsub.f32 1.5, %v135
    %v137 = vmul.f32 %v132, %v136
    %vm138 = vweird.f32 %v98
    %vm139 = vweird.f32 %v132
    %vm140 = vmor %vm138, %vm139
    %v141 = vsel %vm140, %v132, %v137
    %v142 = vrsqrt.pop %v99
    %v143 = vmul.f32 %v142, %v99
    %v144 = vmul.f32 %v143, %v142
    %v145 = vmul.f32 0.5, %v144
    %v146 = vsub.f32 1.5, %v145
    %v147 = vmul.f32 %v142, %v146
    %vm148 = vweird.f32 %v99
    %vm149 = vweird.f32 %v142
    %vm150 = vmor %vm148, %vm149
    %v151 = vsel %vm150, %v142, %v147
    %v152 = vrsqrt.pop %v100
    %v153 = vmul.f32 %v152, %v100
    %v154 = vmul.f32 %v153, %v152
    %v155 = vmul.f32 0.5, %v154
    %v156 = vsub.f32 1.5, %v155
    %v157 = vmul.f32 %v152, %v156
    %vm158 = vweird.f32 %v100
    %vm159 = vweird.f32 %v152
    %vm160 = vmor %vm158, %vm159
    %v161 = vsel %vm160, %v152, %v157
    %v162 = vrsqrt.pop %v101
    %v163 = vmul.f32 %v162, %v101
    %v164 = vmul.f32 %v163, %v162
    %v165 = vmul.f32 0.5, %v164
    %v166 = vsub.f32 1.5, %v165
    %v167 = vmul.f32 %v162, %v166
    %vm168 = vweird.f32 %v101
    %vm169 = vweird.f32 %v162
    %vm170 = vmor %vm168, %vm169
    %v171 = vsel %vm170, %v162, %v167
    %v172 = vrsqrt.pop %v102
    %v173 = vmul.f32 %v172, %v102
    %v174 = vmul.f32 %v173, %v172
    %v175 = vmul.f32 0.5, %v174
    %v176 = vsub.f32 1.5, %v175
    %v177 = vmul.f32 %v172, %v176
    %vm178 = vweird.f32 %v102
    %vm179 = vweird.f32 %v172
    %vm180 = vmor %vm178, %vm179
    %v181 = vsel %vm180, %v172, %v177
    %v182 = vrsqrt.pop %v103
    %v183 = vmul.f32 %v182, %v103
    %v184 = vmul.f32 %v183, %v182
    %v185 = vmul.f32 0.5, %v184
    %v186 = vsub.f32 1.5, %v185
    %v187 = vmul.f32 %v182, %v186
    %vm188 = vweird.f32 %v103
    %vm189 = vweird.f32 %v182
    %vm190 = vmor %vm188, %vm189
    %v191 = vsel %vm190, %v182, %v187
    %v192 = vrsqrt.pop %v104
    %v193 = vmul.f32 %v192, %v104
    %v194 = vmul.f32 %v193, %v192
    %v195 = vmul.f32 0.5, %v194
    %v196 = vsub.f32 1.5, %v195
    %v197 = vmul.f32 %v192, %v196
    %vm198 = vweird.f32 %v104
    %vm199 = vweird.f32 %v192
    %vm200 = vmor %vm198, %vm199
    %v201 = vsel %vm200, %v192, %v197
    %v202 = vrsqrt.pop %v105
    %v203 = vmul.f32 %v202, %v105
    %v204 = vmul.f32 %v203, %v202
    %v205 = vmul.f32 0.5, %v204
    %v206 = vsub.f32 1.5, %v205
    %v207 = vmul.f32 %v202, %v206
    %vm208 = vweird.f32 %v105
    %vm209 = vweird.f32 %v202
    %vm210 = vmor %vm208, %vm209
    %v211 = vsel %vm210, %v202, %v207
    %v212 = vrsqrt.pop %v106
    %v213 = vmul.f32 %v212, %v106
    %v214 = vmul.f32 %v213, %v212
    %v215 = vmul.f32 0.5, %v214
    %v216 = vsub.f32 1.5, %v215
    %v217 = vmul.f32 %v212, %v216
    %vm218 = vweird.f32 %v106
    %vm219 = vweird.f32 %v212
    %vm220 = vmor %vm218, %vm219
    %v221 = vsel %vm220, %v212, %v217
    %v222 = vrsqrt.pop %v107
    %v223 = vmul.f32 %v222, %v107
    %v224 = vmul.f32 %v223, %v222
    %v225 = vmul.f32 0.5, %v224
    %v226 = vsub.f32 1.5, %v225
    %v227 = vmul.f32 %v222, %v226
    %vm228 = vweird.f32 %v107
    %vm229 = vweird.f32 %v222
    %vm230 = vmor %vm228, %vm229
    %v231 = vsel %vm230, %v222, %v227
    %v232 = vrsqrt.pop %v108
    %v233 = vmul.f32 %v232, %v108
    %v234 = vmul.f32 %v233, %v232
    %v235 = vmul.f32 0.5, %v234
    %v236 = vsub.f32 1.5, %v235
    %v237 = vmul.f32 %v232, %v236
    %vm238 = vweird.f32 %v108
    %vm239 = vweird.f32 %v232
    %vm240 = vmor %vm238, %vm239
    %v241 = vsel %vm240, %v232, %v237
    %v242 = vrsqrt.pop %v109
    %v243 = vmul.f32 %v242, %v109
    %v244 = vmul.f32 %v243, %v242
    %v245 = vmul.f32 0.5, %v244
    %v246 = vsub.f32 1.5, %v245
    %v247 = vmul.f32 %v242, %v246
    %vm248 = vweird.f32 %v109
    %vm249 = vweird.f32 %v242
    %vm250 = vmor %vm248, %vm249
    %v251 = vsel %vm250, %v242, %v247
    %v252 = vrsqrt.pop %v110
    %v253 = vmul.f32 %v252, %v110
    %v254 = vmul.f32 %v253, %v252
    %v255 = vmul.f32 0.5, %v254
    %v256 = vsub.f32 1.5, %v255
    %v257 = vmul.f32 %v252, %v256
    %vm258 = vweird.f32 %v110
    %vm259 = vweird.f32 %v252
    %vm260 = vmor %vm258, %vm259
    %v261 = vsel %vm260, %v252, %v257
    %v262 = vrsqrt.pop %v111
    %v263 = vmul.f32 %v262, %v111
    %v264 = vmul.f32 %v263, %v262
    %v265 = vmul.f32 0.5, %v264
    %v266 = vsub.f32 1.5, %v265
    %v267 = vmul.f32 %v262, %v266
    %vm268 = vweird.f32 %v111
    %vm269 = vweird.f32 %v262
    %vm270 = vmor %vm268, %vm269
    %v271 = vsel %vm270, %v262, %v267
    %v272 = vmul.f32 %v15, %v121
    %v273 = vmul.f32 %v16, %v131
    %v274 = vmul.f32 %v17, %v141
    %v275 = vmul.f32 %v18, %v151
    %v276 = vmul.f32 %v19, %v161
    %v277 = vmul.f32 %v20, %v171
    %v278 = vmul.f32 %v21, %v181
    %v279 = vmul.f32 %v22, %v191
    %v280 = vmul.f32 %v23, %v201
    %v281 = vmul.f32 %v24, %v211
    %v282 = vmul.f32 %v25, %v221
    %v283 = vmul.f32 %v26, %v231
    %v284 = vmul.f32 %v27, %v241
    %v285 = vmul.f32 %v28, %v251
    %v286 = vmul.f32 %v29, %v261
    %v287 = vmul.f32 %v30, %v271
    %v288 = vld [vmem:[%s0] sm:$0xff]
    %v290 = vsel %vm47, %v288, 0
    %v293 = vsel %vm47, %v272, 0
    %v296 = vsel %vm47, %v273, 0
    %v299 = vsel %vm47, %v274, 0
    %v302 = vsel %vm47, %v275, 0
    %v305 = vsel %vm47, %v276, 0
    %v308 = vsel %vm47, %v277, 0
    %v311 = vsel %vm47, %v278, 0
    %v314 = vsel %vm47, %v279, 0
    %v317 = vsel %vm47, %v280, 0
    %v320 = vsel %vm47, %v281, 0
    %v323 = vsel %vm47, %v282, 0
    %v326 = vsel %vm47, %v283, 0
    %v329 = vsel %vm47, %v284, 0
    %v332 = vsel %vm47, %v285, 0
    %v335 = vsel %vm47, %v286, 0
    %v338 = vsel %vm47, %v287, 0
    %340 = vmatpush.xpose.msra.mxu0 %v338
    %341 = vmatpush.xpose.msra.mxu0 %v335
    %342 = vmatpush.xpose.msra.mxu0 %v332
    %343 = vmatpush.xpose.msra.mxu0 %v329
    %344 = vmatpush.xpose.msra.mxu0 %v326
    %345 = vmatpush.xpose.msra.mxu0 %v323
    %346 = vmatpush.xpose.msra.mxu0 %v320
    %347 = vmatpush.xpose.msra.mxu0 %v317
    %348 = vmatpush.xpose.msra.mxu0 %v314
    %349 = vmatpush.xpose.msra.mxu0 %v311
    %350 = vmatpush.xpose.msra.mxu0 %v308
    %351 = vmatpush.xpose.msra.mxu0 %v305
    %352 = vmatpush.xpose.msra.mxu0 %v302
    %353 = vmatpush.xpose.msra.mxu0 %v299
    %354 = vmatpush.xpose.msra.mxu0 %v296
    %355 = vmatpush.xpose.msra.mxu0 %v293
    %356 = vmatmul.f32.gmra.mxu0 %v290
    %v357 = vpop.f32.mrf.mxu0
    %v358 = vadd.f32 0.0, %v357
    %359 = vdwg.mxu0
    %v360 = vld [vmem:[%s2] sm:$0xff]
    %s361 = smul.u32 0, 128
    %v362 = vstv %s361
    %v363 = vsub.s32 %v360, %v362
    %v364 = vlaneseq
    %v365 = vand.u32 %v364, 127
    %366 = vset.pattern.permute.xlu0 0
    %367 = vperm.xlu0 %366, %v363
    %v368 = vpop.permute.xlu0 %367
    %vm369 = vcmp.eq.s32.totalorder %v365, %v368
    %v370 = vsel %vm369, %v358, 0.0
    %371 = vadd.xlane.f32.xlu0 %v370
    %v372 = vpop.xlane.xlu0 %371
    %v373 = vmul.f32 %v372, %v372
    %v374 = vsub.f32 1.0, %v373
    %v375 = vmax.f32 %v374, 0.0
    %v376 = vmin.f32 %v375, 1.0
    %v377 = vrsqrt.pop %v376
    %v378 = vmul.f32 %v377, %v376
    %v379 = vmul.f32 %v378, %v377
    %v380 = vmul.f32 0.5, %v379
    %v381 = vsub.f32 1.5, %v380
    %v382 = vmul.f32 %v377, %v381
    %v383 = vmul.f32 %v376, %v382
    %vm384 = vcmp.eq.f32.partialorder %v376, inf
    %v385 = vsel %vm384, %v376, %v383
    %vm386 = vcmp.eq.f32.partialorder %v376, 0.0
    %v387 = vand.u32 %v376, 2147483648
    %v388 = vsel %vm386, %v387, %v385
    %v389 = vmul.f32 %v372, 0.87758255
    %v390 = vmul.f32 %v388, 0.47942555
    %v391 = vsub.f32 %v389, %v390
    %vm392 = vcmp.gt.f32.partialorder %v372, -0.87758255
    %v393 = vsub.f32 %v372, 0.23971277
    %v394 = vsel %vm392, %v391, %v393
    %v395 = vsel %vm369, 1, 0
    %v396 = vcvt.s32.f32 %v395
    %v397 = vsub.f32 %v394, %v372
    %v398 = vmul.f32 %v396, %v397
    %v399 = vadd.f32 %v358, %v398
    %v400 = vmul.f32 %v399, 30.0
    %401 = vst [vmem:[#allocation2] sm:$0xff] %v400
    // Predicated region
    $region14: #{tpu_custom_call.1} parent=1 // pred_check
      _
    $region15: #{tpu_custom_call.1} parent=1 // pred_check_branch
      %403 = sbr.rel (0) target = $region17
    $region16: #{tpu_custom_call.1} parent=1 // pred_region
      %405 = vsyncadd [#allocation3], 0
      %s407 = sshll.u32 [#allocation2], 4
      %s408 = int_to_ptr.vmem [resolvable:$true] %s407
      %s409 = sshll.u32 %s3, 4
      %s410 = int_to_ptr.hbm [resolvable:$true] %s409
      %412 = dma.vmem_to_hbm [thread:$0]  %s408, 128, %s410, [#allocation3]
    $region17: #{tpu_custom_call.1} parent=1 // pred_fallthru
      _
    // Predicated region
    $region18: #{tpu_custom_call.1} parent=1 // pred_check
      _
    $region19: #{tpu_custom_call.1} parent=1 // pred_check_branch
      %414 = sbr.rel (0) target = $region21
    $region20: #{tpu_custom_call.1} parent=1 // pred_region
      %416 = dma.done [#allocation3], 128
    $region21: #{tpu_custom_call.1} parent=1 // pred_fallthru
      _
    %417 = vsyncpa [#allocation3], 1

</llo_original>
